<compile_context>
chip_gen: v7x
topology: tpu7x:2x2x1
jax: 0.10.0
libtpu: 0.0.40
codegen_flags: <defaults>
</compile_context>

<pallas_src>
import functools
import math

import jax
import jax.numpy as jnp
from jax.experimental import pallas as pl
from jax.experimental.pallas import tpu as pltpu

_LANE = 128
_TINY_BYTES = 128 * 1024             # below this, plain XLA fusion beats a Pallas launch
_MIN_SPLIT_BYTES = 1 * 1024 * 1024   # slabs above this get >=2 (even) grid steps (v7x 2 TCs)


@functools.lru_cache(maxsize=1)
def _block_budget_bytes():
    """Combined (x + y + out) bytes per grid step, scaled per TPU generation."""
    try:
        kind = jax.devices()[0].device_kind.lower()
    except Exception:
        kind = ""
    if "v7" in kind:                    # ~3.2 TB/s HBM, 64 MiB physical VMEM -> big blocks
        return 12 * 1024 * 1024
    if "v5 lite" in kind or "v5e" in kind or "v5lite" in kind:
        return 5 * 1024 * 1024          # 16 MiB default scoped VMEM, ~0.8 TB/s HBM
    return 8 * 1024 * 1024              # v6e and friends


def _div_kernel(x_ref, y_ref, o_ref, *, rounding_mode, compute_dtype,
                x_scalar, y_scalar):
    x = (x_ref[0, 0] if x_scalar else x_ref[...]).astype(compute_dtype)
    y = (y_ref[0, 0] if y_scalar else y_ref[...]).astype(compute_dtype)
    q = x / y                            # exact division; op is HBM-bound, VPU has slack
    if rounding_mode == "trunc":
        q = jnp.trunc(q)
    elif rounding_mode == "floor":
        q = jnp.floor(q)
    o_ref[...] = q.astype(o_ref.dtype)


def pallas_div(x, y, rounding_mode=None):
    """Elementwise torch.div(x, y, rounding_mode=...) on TPU via Pallas."""
    if rounding_mode not in (None, "trunc", "floor"):
        raise ValueError(f"unsupported rounding_mode: {rounding_mode!r}")
    x = jnp.asarray(x)
    y = jnp.asarray(y)
    out_shape = jnp.broadcast_shapes(x.shape, y.shape)
    n = math.prod(out_shape)

    in_dtype = jnp.result_type(x.dtype, y.dtype)
    if jnp.issubdtype(in_dtype, jnp.floating):
        out_dtype = in_dtype
        # bf16/f16 divide in f32 (torch opmath); free, the kernel is HBM-bound.
        compute_dtype = in_dtype if jnp.dtype(in_dtype).itemsize >= 4 else jnp.float32
    else:
        # Integer/bool inputs: true division returns float32; trunc/floor keep int dtype.
        # TODO(synk): exact integer trunc/floor for |values| > 2**24 needs an integer path.
        out_dtype = jnp.float32 if rounding_mode is None else in_dtype
        compute_dtype = jnp.float32

    def _jnp_div(a, b):
        q = a.astype(compute_dtype) / b.astype(compute_dtype)
        if rounding_mode == "trunc":
            q = jnp.trunc(q)
        elif rounding_mode == "floor":
            q = jnp.floor(q)
        return q

    if n == 0:
        return jnp.zeros(out_shape, out_dtype)

    itemsizes = (jnp.dtype(x.dtype).itemsize, jnp.dtype(y.dtype).itemsize,
                 jnp.dtype(out_dtype).itemsize)
    if n * sum(itemsizes) < _TINY_BYTES:
        # Launch + pipeline prologue dominates tiny tensors; let XLA fuse it.
        return jnp.broadcast_to(_jnp_div(x, y), out_shape).astype(out_dtype)

    x_scalar = x.size == 1
    y_scalar = y.size == 1
    if (x.shape != y.shape and not (x_scalar or y_scalar)) or (x_scalar and y_scalar):
        # General non-scalar broadcasting: materializing the broadcast would double
        # HBM traffic; XLA's single fused pass is already optimal here.
        # TODO(synk): row-broadcast BlockSpec (index_map -> block 0) for this case.
        return jnp.broadcast_to(_jnp_div(x, y), out_shape).astype(out_dtype)

    # ----- lane-dense slab layout --------------------------------------------
    main_n = (n // _LANE) * _LANE
    tail_n = n - main_n
    width = _LANE
    for w in (8 * _LANE, 4 * _LANE, 2 * _LANE):
        if main_n % w == 0:
            width = w
            break
    rows = main_n // width

    vmem_itemsizes = [jnp.dtype(out_dtype).itemsize]
    if not x_scalar:
        vmem_itemsizes.append(jnp.dtype(x.dtype).itemsize)
    if not y_scalar:
        vmem_itemsizes.append(jnp.dtype(y.dtype).itemsize)
    gran = max(8, 32 // min(vmem_itemsizes))       # native sublane packing per dtype
    per_row_bytes = width * sum(vmem_itemsizes)
    slab_bytes = rows * per_row_bytes

    budget = _block_budget_bytes()
    block_rows = min(rows, max(gran, (budget // per_row_bytes) // gran * gran))
    steps = pl.cdiv(rows, block_rows)
    if slab_bytes > _MIN_SPLIT_BYTES:
        # Guarantee >=2 (prefer even) grid steps so both v7x TensorCores get work.
        steps = max(steps, 2)
        if steps % 2:
            steps += 1
        br = -(-rows // steps)                      # ceil(rows / steps)
        br = -(-br // gran) * gran                  # round up to sublane granularity
        block_rows = min(rows, max(gran, br))
        steps = pl.cdiv(rows, block_rows)

    block_bytes = block_rows * per_row_bytes
    # Explicit scoped-VMEM limit: 2x (double-buffered) block + headroom; safe on all
    # generations (v5e/v6e physical 128 MiB, v7x physical 64 MiB).
    vmem_limit = int(min(64 * 1024 * 1024,
                         max(24 * 1024 * 1024, 2 * block_bytes + 8 * 1024 * 1024)))

    def _main2d(a):
        flat = a.reshape(-1)
        if tail_n:
            flat = flat[:main_n]
        return flat.reshape(rows, width)

    tile_spec = pl.BlockSpec((block_rows, width), lambda i: (i, 0))
    smem_spec = pl.BlockSpec(memory_space=pltpu.MemorySpace.SMEM)

    if x_scalar:
        x_in, x_spec = x.reshape(1, 1).astype(compute_dtype), smem_spec
    else:
        x_in, x_spec = _main2d(x), tile_spec
    if y_scalar:
        y_in, y_spec = y.reshape(1, 1).astype(compute_dtype), smem_spec
    else:
        y_in, y_spec = _main2d(y), tile_spec

    kernel = functools.partial(
        _div_kernel, rounding_mode=rounding_mode, compute_dtype=compute_dtype,
        x_scalar=x_scalar, y_scalar=y_scalar)

    out_main = pl.pallas_call(
        kernel,
        out_shape=jax.ShapeDtypeStruct((rows, width), out_dtype),
        grid=(steps,),
        in_specs=[x_spec, y_spec],
        out_specs=pl.BlockSpec((block_rows, width), lambda i: (i, 0)),
        compiler_params=pltpu.CompilerParams(
            dimension_semantics=("parallel",),
            vmem_limit_bytes=vmem_limit),
        cost_estimate=pl.CostEstimate(
            flops=main_n, transcendentals=0,
            bytes_accessed=main_n * sum(vmem_itemsizes)),
    )(x_in, y_in)

    out_flat = out_main.reshape(-1)
    if tail_n:
        # Ragged (<128 element) remainder: tiny fused XLA epilogue, no pad/slice of
        # the full tensors.
        xt = x.reshape(()) if x_scalar else x.reshape(-1)[main_n:]
        yt = y.reshape(()) if y_scalar else y.reshape(-1)[main_n:]
        qt = jnp.broadcast_to(_jnp_div(xt, yt), (tail_n,)).astype(out_dtype)
        out_flat = jnp.concatenate([out_flat, qt])
    return out_flat.reshape(out_shape)


class ModelWithRounding:
    """JAX/Pallas mirror of the PyTorch module."""

    def __init__(self, rounding_mode=None):
        self.rounding_mode = rounding_mode

    def __call__(self, x, y):
        return pallas_div(x, y, rounding_mode=self.rounding_mode)


if __name__ == "__main__":
    key = jax.random.PRNGKey(0)
    ok = True

    def ref_div(a, b, mode, out_dtype=None):
        q = a.astype(jnp.float32) / b.astype(jnp.float32)
        if mode == "trunc":
            q = jnp.trunc(q)
        elif mode == "floor":
            q = jnp.floor(q)
        return q if out_dtype is None else q.astype(out_dtype)

    def check(name, out, ref, atol=1e-6, rtol=1e-6):
        good = (out.shape == ref.shape and out.dtype == ref.dtype
                and bool(jnp.allclose(out, ref, rtol=rtol, atol=atol)))
        if not good:
            print(f"MISMATCH {name}")
        return good

    def rand_pair(k, shape, dtype=jnp.float32):
        ka, kb, kc = jax.random.split(k, 3)
        xv = (jax.random.normal(ka, shape, jnp.float32) * 5.0).astype(dtype)
        mag = jax.random.uniform(kb, shape, jnp.float32, minval=0.5, maxval=2.0)
        sgn = jnp.where(jax.random.bernoulli(kc, 0.5, shape), 1.0, -1.0)
        return xv, (mag * sgn).astype(dtype)

    # tiny XLA fast path / multi-step Pallas / partial-last-block / ragged tail
    cases = [((2, 4, 16, 16), (None, "trunc", "floor")),
             ((4, 8, 64, 128), (None, "trunc", "floor")),
             ((3, 257, 384), ("floor",)),
             ((5, 7, 11, 101), (None,))]
    for idx, (shape, modes) in enumerate(cases):
        x, y = rand_pair(jax.random.fold_in(key, idx), shape)
        for mode in modes:
            out = jax.block_until_ready(ModelWithRounding(mode)(x, y))
            ok &= check(f"f32 {shape} {mode}", out, ref_div(x, y, mode, jnp.float32))

    # Scalar divisor -> SMEM path (no broadcast materialization in HBM).
    xs, _ = rand_pair(jax.random.fold_in(key, 100), (4, 8, 64, 128))
    ys = jnp.float32(-1.7)
    for mode in (None, "trunc"):
        out = jax.block_until_ready(ModelWithRounding(mode)(xs, ys))
        ok &= check(f"scalar-div {mode}", out, ref_div(xs, ys, mode, jnp.float32))

    # Integer inputs.
    k1, k2, k3 = jax.random.split(jax.random.fold_in(key, 200), 3)
    xi = jax.random.randint(k1, (4, 8, 64, 128), -1000, 1000, dtype=jnp.int32)
    yi = jax.random.randint(k2, (4, 8, 64, 128), 1, 10, dtype=jnp.int32)
    yi = yi * jnp.where(jax.random.bernoulli(k3, 0.5, yi.shape), 1, -1).astype(jnp.int32)
    out = jax.block_until_ready(pallas_div(xi, yi, None))
    ok &= check("int32 none", out, xi.astype(jnp.float32) / yi.astype(jnp.float32))
    out = jax.block_until_ready(pallas_div(xi, yi, "floor"))
    ok &= check("int32 floor", out, jnp.floor_divide(xi, yi), atol=0, rtol=0)
    out = jax.block_until_ready(pallas_div(xi, yi, "trunc"))
    ref_t = jnp.trunc(xi.astype(jnp.float32) / yi.astype(jnp.float32)).astype(jnp.int32)
    ok &= check("int32 trunc", out, ref_t, atol=0, rtol=0)

    # bf16 inputs: f32 opmath inside the kernel, bf16 output.
    xb, yb = rand_pair(jax.random.fold_in(key, 300), (4, 8, 64, 128), jnp.bfloat16)
    out = jax.block_until_ready(pallas_div(xb, yb, "floor"))
    ok &= check("bf16 floor", out, ref_div(xb, yb, "floor", jnp.bfloat16))

    if ok:
        print("KERNEL_OK")
</pallas_src>

<mosaic_0001>
module attributes {stable_mosaic.version = 11 : i64} {
  func.func @_div_kernel(%arg0: i32, %arg1: memref<128x1024xf32, #tpu.memory_space<vmem>>, %arg2: memref<128x1024xf32, #tpu.memory_space<vmem>>, %arg3: memref<128x1024xf32, #tpu.memory_space<vmem>>) attributes {dimension_semantics = [#tpu.dimension_semantics<parallel>], iteration_bounds = array<i64: 2>, scalar_prefetch = 0 : i64, scratch_operands = 0 : i64, tpu.core_type = #tpu.core_type<tc>, window_params = [{transform_indices = @transform_0, window_bounds = array<i64: 128, 1024>}, {transform_indices = @transform_1, window_bounds = array<i64: 128, 1024>}, {transform_indices = @transform_2, window_bounds = array<i64: 128, 1024>}]} {
    %c0 = arith.constant 0 : index
    %c0_0 = arith.constant 0 : index
    %0 = vector.load %arg1[%c0, %c0_0] : memref<128x1024xf32, #tpu.memory_space<vmem>>, vector<128x1024xf32>
    %c0_1 = arith.constant 0 : index
    %c0_2 = arith.constant 0 : index
    %1 = vector.load %arg2[%c0_1, %c0_2] : memref<128x1024xf32, #tpu.memory_space<vmem>>, vector<128x1024xf32>
    %2 = arith.divf %0, %1 : vector<128x1024xf32>
    %c0_3 = arith.constant 0 : index
    %c0_4 = arith.constant 0 : index
    %3 = vector.load %arg3[%c0_3, %c0_4] : memref<128x1024xf32, #tpu.memory_space<vmem>>, vector<128x1024xf32>
    tpu.vector_store %arg3[%c0_3, %c0_4], %2 {strides = array<i32>} : memref<128x1024xf32, #tpu.memory_space<vmem>>, vector<128x1024xf32>,
    return
  }
  func.func @transform_0(%arg0: i32) -> (i32, i32) {
    %c0_i32 = arith.constant 0 : i32
    %c0_i32_0 = arith.constant 0 : i32
    return %arg0, %c0_i32 : i32, i32
  }
  func.func @transform_1(%arg0: i32) -> (i32, i32) {
    %c0_i32 = arith.constant 0 : i32
    %c0_i32_0 = arith.constant 0 : i32
    return %arg0, %c0_i32 : i32, i32
  }
  func.func @transform_2(%arg0: i32) -> (i32, i32) {
    %c0_i32 = arith.constant 0 : i32
    %c0_i32_0 = arith.constant 0 : i32
    return %arg0, %c0_i32 : i32, i32
  }
}

</mosaic_0001>

<llo_original>
// kernel: tpu_custom_call.1
$region0: #{tpu_custom_call.1}
  #allocation0 [shape = 'u32[]', space=smem, size = 0x4, offset = 0x4, fixed_abs, tag = 'smem constant byte address 0x4 - core index']
  #allocation1 [shape = 'u32[144,128]{1,0:T(1,128)}', space=vmem, size = 0x12000, scoped, tag = 'internal scratch']
  %s0 = inlined_call_operand.hbm [shape: f32[256,1024], index: 0, kind: input, shape index: {}]
  %s1 = inlined_call_operand.hbm [shape: f32[256,1024], index: 1, kind: input, shape index: {}]
  %s2 = inlined_call_operand.hbm [shape: f32[256,1024], index: 2, kind: output, shape index: {}]
  %s3 = sld [smem:[#allocation0]]
  $region49: #{tpu_custom_call.1} parent=0
    _
  %s5 = ssub.s32 1, %s3
  %s6 = scalar_select 0, %s5, %s3
  $region1: #{tpu_custom_call.1} parent=0
    #allocation2 [shape = 'u8[1048576]{0}', space=vmem, size = 0x100000, scoped, tag = 'input window, operand 0']
    #allocation3 [shape = 's32[2]{0}', space=sflag, size = 0x8, scoped, tag = 'scoped memory for tpu_custom_call.1']
    #allocation4 [shape = 's32[2]{0}', space=sflag, size = 0x8, scoped, tag = 'scoped memory for tpu_custom_call.1']
    #allocation5 [shape = 'u8[1048576]{0}', space=vmem, size = 0x100000, scoped, tag = 'input window, operand 1']
    #allocation6 [shape = 's32[2]{0}', space=sflag, size = 0x8, scoped, tag = 'scoped memory for tpu_custom_call.1']
    #allocation7 [shape = 'u8[1048576]{0}', space=vmem, size = 0x100000, scoped, tag = 'output window, operand 0']
    %7 = vsyncpa [#allocation3], 0
    %s8 = scalar_lea.sflag [#allocation3], 1
    %9 = vsyncpa %s8, 0
    %10 = vsyncpa [#allocation6], 0
    %s11 = scalar_lea.sflag [#allocation6], 1
    %12 = vsyncpa %s11, 0
    %13 = vsyncpa [#allocation4], 0
    %s14 = scalar_lea.sflag [#allocation4], 1
    %15 = vsyncpa %s14, 0
    loop: start=0, step=1, limit=4
    $region2: #{tpu_custom_call.1} parent=1 // loop_pre_header
      _
    $region3: #{tpu_custom_call.1} parent=1 // loop_header
      %s17 = sphi 0, %s21
      %p18 = scmp.ge.s32.totalorder %s17, 4
      %s27 = sphi 0, %s29
      %s30 = sphi 0, %s27
      %s31 = sphi 0, %s30
      %s47 = sphi 0, %s31
      %s53 = sphi 0, %s55
      %s56 = sphi 0, %s53
      %s57 = sphi 0, %s56
      %s73 = sphi 0, %s57
      %s79 = sphi 0, %s81
      %s82 = sphi 0, %s79
      %s83 = sphi 0, %s82
      %s99 = sphi 0, %s83
    $region4: #{tpu_custom_call.1} parent=1 // loop_header_branch
      %20 = sbr.rel (%p18) target = $region8
    $region5: #{tpu_custom_call.1} parent=1 // loop_body
      %s22 = ssub.s32 %s17, 1
      %s23 = ssub.s32 %s17, 2
      %s24 = sadd.s32 %s17, 1
      %s25 = ssub.s32 %s17, %s24
      %p26 = scmp.eq.s32.totalorder %s25, 0
      %s28 = sadd.s32 %s27, 1
      %s29 = scalar_select %p26, %s27, %s28
      %p32 = pneg %p26
      %p33 = scmp.eq.s32.totalorder %s17, 1
      %p34 = por %p32, %p33
      %p35 = scmp.ne.s32.totalorder %s27, %s30
      %p36 = scmp.eq.s32.totalorder %s17, 0
      %p37 = por %p35, %p36
      %p38 = scmp.ne.s32.totalorder %s27, %s30
      %p39 = scmp.eq.s32.totalorder %s22, 1
      %p40 = por %p38, %p39
      %p41 = scmp.ne.s32.totalorder %s30, %s31
      %p42 = scmp.eq.s32.totalorder %s22, 0
      %p43 = por %p41, %p42
      %p44 = scmp.ne.s32.totalorder %s30, %s31
      %p45 = scmp.eq.s32.totalorder %s23, 1
      %p46 = por %p44, %p45
      %p48 = scmp.ne.s32.totalorder %s31, %s47
      %p49 = scmp.eq.s32.totalorder %s23, 0
      %p50 = por %p48, %p49
      %s51 = ssub.s32 %s17, %s24
      %p52 = scmp.eq.s32.totalorder %s51, 0
      %s54 = sadd.s32 %s53, 1
      %s55 = scalar_select %p52, %s53, %s54
      %p58 = pneg %p52
      %p59 = scmp.eq.s32.totalorder %s17, 1
      %p60 = por %p58, %p59
      %p61 = scmp.ne.s32.totalorder %s53, %s56
      %p62 = scmp.eq.s32.totalorder %s17, 0
      %p63 = por %p61, %p62
      %p64 = scmp.ne.s32.totalorder %s53, %s56
      %p65 = scmp.eq.s32.totalorder %s22, 1
      %p66 = por %p64, %p65
      %p67 = scmp.ne.s32.totalorder %s56, %s57
      %p68 = scmp.eq.s32.totalorder %s22, 0
      %p69 = por %p67, %p68
      %p70 = scmp.ne.s32.totalorder %s56, %s57
      %p71 = scmp.eq.s32.totalorder %s23, 1
      %p72 = por %p70, %p71
      %p74 = scmp.ne.s32.totalorder %s57, %s73
      %p75 = scmp.eq.s32.totalorder %s23, 0
      %p76 = por %p74, %p75
      %s77 = ssub.s32 %s17, %s24
      %p78 = scmp.eq.s32.totalorder %s77, 0
      %s80 = sadd.s32 %s79, 1
      %s81 = scalar_select %p78, %s79, %s80
      %p84 = pneg %p78
      %p85 = scmp.eq.s32.totalorder %s17, 1
      %p86 = por %p84, %p85
      %p87 = scmp.ne.s32.totalorder %s79, %s82
      %p88 = scmp.eq.s32.totalorder %s17, 0
      %p89 = por %p87, %p88
      %p90 = scmp.ne.s32.totalorder %s79, %s82
      %p91 = scmp.eq.s32.totalorder %s22, 1
      %p92 = por %p90, %p91
      %p93 = scmp.ne.s32.totalorder %s82, %s83
      %p94 = scmp.eq.s32.totalorder %s22, 0
      %p95 = por %p93, %p94
      %p96 = scmp.ne.s32.totalorder %s82, %s83
      %p97 = scmp.eq.s32.totalorder %s23, 1
      %p98 = por %p96, %p97
      %p100 = scmp.ne.s32.totalorder %s83, %s99
      %p101 = scmp.eq.s32.totalorder %s23, 0
      %p102 = por %p100, %p101
      %p103 = scmp.le.s32.totalorder 1, %s17
      %p104 = scmp.lt.s32.totalorder %s17, 3
      %p105 = pnand %p103, %p104
      %p106 = pneg %p105
      // Predicated region
      $region9: #{tpu_custom_call.1} parent=5 // pred_check
        _
      $region10: #{tpu_custom_call.1} parent=5 // pred_check_branch
        %108 = sbr.rel (%p105) target = $region12
      $region11: #{tpu_custom_call.1} parent=5 // pred_region
        %s109 = ssub.s32 %s17, 1
      $region12: #{tpu_custom_call.1} parent=5 // pred_fallthru
        _
      %p110 = scmp.lt.s32.totalorder %s17, 2
      // Predicated region
      $region13: #{tpu_custom_call.1} parent=5 // pred_check
        %p111 = pneg %p110
      $region14: #{tpu_custom_call.1} parent=5 // pred_check_branch
        %113 = sbr.rel (%p111) target = $region16
      $region15: #{tpu_custom_call.1} parent=5 // pred_region
        // Predicated region
        $region17: #{tpu_custom_call.1} parent=15 // pred_check
          %p114 = pneg %p37
        $region18: #{tpu_custom_call.1} parent=15 // pred_check_branch
          %116 = sbr.rel (%p114) target = $region20
        $region19: #{tpu_custom_call.1} parent=15 // pred_region
          %s117 = sand.u32 %s27, 1
          %s118 = scalar_lea.sflag [#allocation3], %s117
          %s119 = sand.u32 %s27, 1
          %s120 = smul.addr %s119, 1024
          %s121 = scalar_lea.vmem [#allocation2], %s120
          %s122 = smul.u32 16, %s17
          %s124 = ssub.s32 16384, 16384
          %125 = vsyncadd %s118, %s124
          %s126 = smul.addr %s122, 8
          %s127 = smul.addr %s126, 128
          %s128 = scalar_lea.hbm %s0, %s127
          %s129 = sshll.u32 %s121, 4
          %s130 = int_to_ptr.vmem [resolvable:$true] %s129
          %135 = dma.hbm_to_vmem [thread:$0]  %s128, 16384, %s130, %s118, 1024, 1024, 64
        $region20: #{tpu_custom_call.1} parent=15 // pred_fallthru
          _
        // Predicated region
        $region21: #{tpu_custom_call.1} parent=15 // pred_check
          %p136 = pneg %p63
        $region22: #{tpu_custom_call.1} parent=15 // pred_check_branch
          %138 = sbr.rel (%p136) target = $region24
        $region23: #{tpu_custom_call.1} parent=15 // pred_region
          %s139 = sand.u32 %s53, 1
          %s140 = scalar_lea.sflag [#allocation6], %s139
          %s141 = sand.u32 %s53, 1
          %s142 = smul.addr %s141, 1024
          %s143 = scalar_lea.vmem [#allocation5], %s142
          %s144 = smul.u32 16, %s17
          %s146 = ssub.s32 16384, 16384
          %147 = vsyncadd %s140, %s146
          %s148 = smul.addr %s144, 8
          %s149 = smul.addr %s148, 128
          %s150 = scalar_lea.hbm %s1, %s149
          %s151 = sshll.u32 %s143, 4
          %s152 = int_to_ptr.vmem [resolvable:$true] %s151
          %157 = dma.hbm_to_vmem [thread:$0]  %s150, 16384, %s152, %s140, 1024, 1024, 64
        $region24: #{tpu_custom_call.1} parent=15 // pred_fallthru
          _
      $region16: #{tpu_custom_call.1} parent=5 // pred_fallthru
        _
      %p158 = scmp.le.s32.totalorder 1, %s17
      %p159 = scmp.lt.s32.totalorder %s17, 3
      %p160 = pnand %p158, %p159
      %p161 = pneg %p160
      // Predicated region
      $region25: #{tpu_custom_call.1} parent=5 // pred_check
        _
      $region26: #{tpu_custom_call.1} parent=5 // pred_check_branch
        %163 = sbr.rel (%p160) target = $region28
      $region27: #{tpu_custom_call.1} parent=5 // pred_region
        %s164 = ssub.s32 %s17, 1
        %s165 = sand.u32 %s30, 1
        %s166 = scalar_lea.sflag [#allocation3], %s165
        %s167 = sand.u32 %s30, 1
        %s168 = smul.addr %s167, 1024
        %s169 = scalar_lea.vmem [#allocation2], %s168
        // Predicated region
        $region29: #{tpu_custom_call.1} parent=27 // pred_check
          %p170 = pneg %p43
        $region30: #{tpu_custom_call.1} parent=27 // pred_check_branch
          %172 = sbr.rel (%p170) target = $region32
        $region31: #{tpu_custom_call.1} parent=27 // pred_region
          %173 = dma.done %s166, 16384
        $region32: #{tpu_custom_call.1} parent=27 // pred_fallthru
          _
        %s174 = sand.u32 %s56, 1
        %s175 = scalar_lea.sflag [#allocation6], %s174
        %s176 = sand.u32 %s56, 1
        %s177 = smul.addr %s176, 1024
        %s178 = scalar_lea.vmem [#allocation5], %s177
        // Predicated region
        $region33: #{tpu_custom_call.1} parent=27 // pred_check
          %p179 = pneg %p69
        $region34: #{tpu_custom_call.1} parent=27 // pred_check_branch
          %181 = sbr.rel (%p179) target = $region36
        $region35: #{tpu_custom_call.1} parent=27 // pred_region
          %182 = dma.done %s175, 16384
        $region36: #{tpu_custom_call.1} parent=27 // pred_fallthru
          _
        %s183 = sand.u32 %s30, 1
        %s184 = scalar_lea.sflag [#allocation3], %s183
        %s185 = sand.u32 %s30, 1
        %s186 = smul.addr %s185, 1024
        %s187 = scalar_lea.vmem [#allocation2], %s186
        %p188 = pneg %p43
        %p189 = pneg %p40
        %s190 = sand.u32 %s56, 1
        %s191 = scalar_lea.sflag [#allocation6], %s190
        %s192 = sand.u32 %s56, 1
        %s193 = smul.addr %s192, 1024
        %s194 = scalar_lea.vmem [#allocation5], %s193
        %p195 = pneg %p69
        %p196 = pneg %p66
        %p197 = pneg %p95
        %p198 = pneg %p92
        %s199 = sand.u32 %s82, 1
        %s200 = scalar_lea.sflag [#allocation4], %s199
        %s201 = sand.u32 %s82, 1
        %s202 = smul.addr %s201, 1024
        %s203 = scalar_lea.vmem [#allocation7], %s202
        %s204 = smul.u32 16, %s22
        %s205 = smul.u32 16, %s22
        %s206 = smul.u32 16, %s22
        %v207 = vld [vmem:[%s169] sm:$0xff]
        %v208 = vld [vmem:[%s169 + $0x8] sm:$0xff]
        %v209 = vld [vmem:[%s169 + $0x10] sm:$0xff]
        %v210 = vld [vmem:[%s169 + $0x18] sm:$0xff]
        %v211 = vld [vmem:[%s169 + $0x20] sm:$0xff]
        %v212 = vld [vmem:[%s169 + $0x28] sm:$0xff]
        %v213 = vld [vmem:[%s169 + $0x30] sm:$0xff]
        %v214 = vld [vmem:[%s169 + $0x38] sm:$0xff]
        %v215 = vld [vmem:[%s169 + $0x40] sm:$0xff]
        %v216 = vld [vmem:[%s169 + $0x48] sm:$0xff]
        %v217 = vld [vmem:[%s169 + $0x50] sm:$0xff]
        %v218 = vld [vmem:[%s169 + $0x58] sm:$0xff]
        %v219 = vld [vmem:[%s169 + $0x60] sm:$0xff]
        %v220 = vld [vmem:[%s169 + $0x68] sm:$0xff]
        %v221 = vld [vmem:[%s169 + $0x70] sm:$0xff]
        %v222 = vld [vmem:[%s169 + $0x78] sm:$0xff]
        %v223 = vld [vmem:[%s169 + $0x80] sm:$0xff]
        %v224 = vld [vmem:[%s169 + $0x88] sm:$0xff]
        %v225 = vld [vmem:[%s169 + $0x90] sm:$0xff]
        %v226 = vld [vmem:[%s169 + $0x98] sm:$0xff]
        %v227 = vld [vmem:[%s169 + $0xa0] sm:$0xff]
        %v228 = vld [vmem:[%s169 + $0xa8] sm:$0xff]
        %v229 = vld [vmem:[%s169 + $0xb0] sm:$0xff]
        %v230 = vld [vmem:[%s169 + $0xb8] sm:$0xff]
        %v231 = vld [vmem:[%s169 + $0xc0] sm:$0xff]
        %v232 = vld [vmem:[%s169 + $0xc8] sm:$0xff]
        %v233 = vld [vmem:[%s169 + $0xd0] sm:$0xff]
        %v234 = vld [vmem:[%s169 + $0xd8] sm:$0xff]
        %v235 = vld [vmem:[%s169 + $0xe0] sm:$0xff]
        %v236 = vld [vmem:[%s169 + $0xe8] sm:$0xff]
        %v237 = vld [vmem:[%s169 + $0xf0] sm:$0xff]
        %v238 = vld [vmem:[%s169 + $0xf8] sm:$0xff]
        %v239 = vld [vmem:[%s169 + $0x100] sm:$0xff]
        %v240 = vld [vmem:[%s169 + $0x108] sm:$0xff]
        %v241 = vld [vmem:[%s169 + $0x110] sm:$0xff]
        %v242 = vld [vmem:[%s169 + $0x118] sm:$0xff]
        %v243 = vld [vmem:[%s169 + $0x120] sm:$0xff]
        %v244 = vld [vmem:[%s169 + $0x128] sm:$0xff]
        %v245 = vld [vmem:[%s169 + $0x130] sm:$0xff]
        %v246 = vld [vmem:[%s169 + $0x138] sm:$0xff]
        %v247 = vld [vmem:[%s169 + $0x140] sm:$0xff]
        %v248 = vld [vmem:[%s169 + $0x148] sm:$0xff]
        %v249 = vld [vmem:[%s169 + $0x150] sm:$0xff]
        %v250 = vld [vmem:[%s169 + $0x158] sm:$0xff]
        %v251 = vld [vmem:[%s169 + $0x160] sm:$0xff]
        %v252 = vld [vmem:[%s169 + $0x168] sm:$0xff]
        %v253 = vld [vmem:[%s169 + $0x170] sm:$0xff]
        %v254 = vld [vmem:[%s169 + $0x178] sm:$0xff]
        %v255 = vld [vmem:[%s169 + $0x180] sm:$0xff]
        %v256 = vld [vmem:[%s169 + $0x188] sm:$0xff]
        %v257 = vld [vmem:[%s169 + $0x190] sm:$0xff]
        %v258 = vld [vmem:[%s169 + $0x198] sm:$0xff]
        %v259 = vld [vmem:[%s169 + $0x1a0] sm:$0xff]
        %v260 = vld [vmem:[%s169 + $0x1a8] sm:$0xff]
        %v261 = vld [vmem:[%s169 + $0x1b0] sm:$0xff]
        %v262 = vld [vmem:[%s169 + $0x1b8] sm:$0xff]
        %v263 = vld [vmem:[%s169 + $0x1c0] sm:$0xff]
        %v264 = vld [vmem:[%s169 + $0x1c8] sm:$0xff]
        %v265 = vld [vmem:[%s169 + $0x1d0] sm:$0xff]
        %v266 = vld [vmem:[%s169 + $0x1d8] sm:$0xff]
        %v267 = vld [vmem:[%s169 + $0x1e0] sm:$0xff]
        %v268 = vld [vmem:[%s169 + $0x1e8] sm:$0xff]
        %v269 = vld [vmem:[%s169 + $0x1f0] sm:$0xff]
        %v270 = vld [vmem:[%s169 + $0x1f8] sm:$0xff]
        %v271 = vld [vmem:[%s169 + $0x200] sm:$0xff]
        %v272 = vld [vmem:[%s169 + $0x208] sm:$0xff]
        %v273 = vld [vmem:[%s169 + $0x210] sm:$0xff]
        %v274 = vld [vmem:[%s169 + $0x218] sm:$0xff]
        %v275 = vld [vmem:[%s169 + $0x220] sm:$0xff]
        %v276 = vld [vmem:[%s169 + $0x228] sm:$0xff]
        %v277 = vld [vmem:[%s169 + $0x230] sm:$0xff]
        %v278 = vld [vmem:[%s169 + $0x238] sm:$0xff]
        %v279 = vld [vmem:[%s169 + $0x240] sm:$0xff]
        %v280 = vld [vmem:[%s169 + $0x248] sm:$0xff]
        %v281 = vld [vmem:[%s169 + $0x250] sm:$0xff]
        %v282 = vld [vmem:[%s169 + $0x258] sm:$0xff]
        %v283 = vld [vmem:[%s169 + $0x260] sm:$0xff]
        %v284 = vld [vmem:[%s169 + $0x268] sm:$0xff]
        %v285 = vld [vmem:[%s169 + $0x270] sm:$0xff]
        %v286 = vld [vmem:[%s169 + $0x278] sm:$0xff]
        %v287 = vld [vmem:[%s169 + $0x280] sm:$0xff]
        %v288 = vld [vmem:[%s169 + $0x288] sm:$0xff]
        %v289 = vld [vmem:[%s169 + $0x290] sm:$0xff]
        %v290 = vld [vmem:[%s169 + $0x298] sm:$0xff]
        %v291 = vld [vmem:[%s169 + $0x2a0] sm:$0xff]
        %v292 = vld [vmem:[%s169 + $0x2a8] sm:$0xff]
        %v293 = vld [vmem:[%s169 + $0x2b0] sm:$0xff]
        %v294 = vld [vmem:[%s169 + $0x2b8] sm:$0xff]
        %v295 = vld [vmem:[%s169 + $0x2c0] sm:$0xff]
        %v296 = vld [vmem:[%s169 + $0x2c8] sm:$0xff]
        %v297 = vld [vmem:[%s169 + $0x2d0] sm:$0xff]
        %v298 = vld [vmem:[%s169 + $0x2d8] sm:$0xff]
        %v299 = vld [vmem:[%s169 + $0x2e0] sm:$0xff]
        %v300 = vld [vmem:[%s169 + $0x2e8] sm:$0xff]
        %v301 = vld [vmem:[%s169 + $0x2f0] sm:$0xff]
        %v302 = vld [vmem:[%s169 + $0x2f8] sm:$0xff]
        %v303 = vld [vmem:[%s169 + $0x300] sm:$0xff]
        %v304 = vld [vmem:[%s169 + $0x308] sm:$0xff]
        %v305 = vld [vmem:[%s169 + $0x310] sm:$0xff]
        %v306 = vld [vmem:[%s169 + $0x318] sm:$0xff]
        %v307 = vld [vmem:[%s169 + $0x320] sm:$0xff]
        %v308 = vld [vmem:[%s169 + $0x328] sm:$0xff]
        %v309 = vld [vmem:[%s169 + $0x330] sm:$0xff]
        %v310 = vld [vmem:[%s169 + $0x338] sm:$0xff]
        %v311 = vld [vmem:[%s169 + $0x340] sm:$0xff]
        %v312 = vld [vmem:[%s169 + $0x348] sm:$0xff]
        %v313 = vld [vmem:[%s169 + $0x350] sm:$0xff]
        %v314 = vld [vmem:[%s169 + $0x358] sm:$0xff]
        %v315 = vld [vmem:[%s169 + $0x360] sm:$0xff]
        %v316 = vld [vmem:[%s169 + $0x368] sm:$0xff]
        %v317 = vld [vmem:[%s169 + $0x370] sm:$0xff]
        %v318 = vld [vmem:[%s169 + $0x378] sm:$0xff]
        %v319 = vld [vmem:[%s169 + $0x380] sm:$0xff]
        %v320 = vld [vmem:[%s169 + $0x388] sm:$0xff]
        %v321 = vld [vmem:[%s169 + $0x390] sm:$0xff]
        %v322 = vld [vmem:[%s169 + $0x398] sm:$0xff]
        %v323 = vld [vmem:[%s169 + $0x3a0] sm:$0xff]
        %v324 = vld [vmem:[%s169 + $0x3a8] sm:$0xff]
        %v325 = vld [vmem:[%s169 + $0x3b0] sm:$0xff]
        %v326 = vld [vmem:[%s169 + $0x3b8] sm:$0xff]
        %v327 = vld [vmem:[%s169 + $0x3c0] sm:$0xff]
        %v328 = vld [vmem:[%s169 + $0x3c8] sm:$0xff]
        %v329 = vld [vmem:[%s169 + $0x3d0] sm:$0xff]
        %v330 = vld [vmem:[%s169 + $0x3d8] sm:$0xff]
        %v331 = vld [vmem:[%s169 + $0x3e0] sm:$0xff]
        %v332 = vld [vmem:[%s169 + $0x3e8] sm:$0xff]
        %v333 = vld [vmem:[%s169 + $0x3f0] sm:$0xff]
        %v334 = vld [vmem:[%s169 + $0x3f8] sm:$0xff]
        %v335 = vld [vmem:[%s178] sm:$0xff]
        %v336 = vld [vmem:[%s178 + $0x8] sm:$0xff]
        %v337 = vld [vmem:[%s178 + $0x10] sm:$0xff]
        %v338 = vld [vmem:[%s178 + $0x18] sm:$0xff]
        %v339 = vld [vmem:[%s178 + $0x20] sm:$0xff]
        %v340 = vld [vmem:[%s178 + $0x28] sm:$0xff]
        %v341 = vld [vmem:[%s178 + $0x30] sm:$0xff]
        %v342 = vld [vmem:[%s178 + $0x38] sm:$0xff]
        %v343 = vld [vmem:[%s178 + $0x40] sm:$0xff]
        %v344 = vld [vmem:[%s178 + $0x48] sm:$0xff]
        %v345 = vld [vmem:[%s178 + $0x50] sm:$0xff]
        %v346 = vld [vmem:[%s178 + $0x58] sm:$0xff]
        %v347 = vld [vmem:[%s178 + $0x60] sm:$0xff]
        %v348 = vld [vmem:[%s178 + $0x68] sm:$0xff]
        %v349 = vld [vmem:[%s178 + $0x70] sm:$0xff]
        %v350 = vld [vmem:[%s178 + $0x78] sm:$0xff]
        %v351 = vld [vmem:[%s178 + $0x80] sm:$0xff]
        %v352 = vld [vmem:[%s178 + $0x88] sm:$0xff]
        %v353 = vld [vmem:[%s178 + $0x90] sm:$0xff]
        %v354 = vld [vmem:[%s178 + $0x98] sm:$0xff]
        %v355 = vld [vmem:[%s178 + $0xa0] sm:$0xff]
        %v356 = vld [vmem:[%s178 + $0xa8] sm:$0xff]
        %v357 = vld [vmem:[%s178 + $0xb0] sm:$0xff]
        %v358 = vld [vmem:[%s178 + $0xb8] sm:$0xff]
        %v359 = vld [vmem:[%s178 + $0xc0] sm:$0xff]
        %v360 = vld [vmem:[%s178 + $0xc8] sm:$0xff]
        %v361 = vld [vmem:[%s178 + $0xd0] sm:$0xff]
        %v362 = vld [vmem:[%s178 + $0xd8] sm:$0xff]
        %v363 = vld [vmem:[%s178 + $0xe0] sm:$0xff]
        %v364 = vld [vmem:[%s178 + $0xe8] sm:$0xff]
        %v365 = vld [vmem:[%s178 + $0xf0] sm:$0xff]
        %v366 = vld [vmem:[%s178 + $0xf8] sm:$0xff]
        %v367 = vld [vmem:[%s178 + $0x100] sm:$0xff]
        %v368 = vld [vmem:[%s178 + $0x108] sm:$0xff]
        %v369 = vld [vmem:[%s178 + $0x110] sm:$0xff]
        %v370 = vld [vmem:[%s178 + $0x118] sm:$0xff]
        %v371 = vld [vmem:[%s178 + $0x120] sm:$0xff]
        %v372 = vld [vmem:[%s178 + $0x128] sm:$0xff]
        %v373 = vld [vmem:[%s178 + $0x130] sm:$0xff]
        %v374 = vld [vmem:[%s178 + $0x138] sm:$0xff]
        %v375 = vld [vmem:[%s178 + $0x140] sm:$0xff]
        %v376 = vld [vmem:[%s178 + $0x148] sm:$0xff]
        %v377 = vld [vmem:[%s178 + $0x150] sm:$0xff]
        %v378 = vld [vmem:[%s178 + $0x158] sm:$0xff]
        %v379 = vld [vmem:[%s178 + $0x160] sm:$0xff]
        %v380 = vld [vmem:[%s178 + $0x168] sm:$0xff]
        %v381 = vld [vmem:[%s178 + $0x170] sm:$0xff]
        %v382 = vld [vmem:[%s178 + $0x178] sm:$0xff]
        %v383 = vld [vmem:[%s178 + $0x180] sm:$0xff]
        %v384 = vld [vmem:[%s178 + $0x188] sm:$0xff]
        %v385 = vld [vmem:[%s178 + $0x190] sm:$0xff]
        %v386 = vld [vmem:[%s178 + $0x198] sm:$0xff]
        %v387 = vld [vmem:[%s178 + $0x1a0] sm:$0xff]
        %v388 = vld [vmem:[%s178 + $0x1a8] sm:$0xff]
        %v389 = vld [vmem:[%s178 + $0x1b0] sm:$0xff]
        %v390 = vld [vmem:[%s178 + $0x1b8] sm:$0xff]
        %v391 = vld [vmem:[%s178 + $0x1c0] sm:$0xff]
        %v392 = vld [vmem:[%s178 + $0x1c8] sm:$0xff]
        %v393 = vld [vmem:[%s178 + $0x1d0] sm:$0xff]
        %v394 = vld [vmem:[%s178 + $0x1d8] sm:$0xff]
        %v395 = vld [vmem:[%s178 + $0x1e0] sm:$0xff]
        %v396 = vld [vmem:[%s178 + $0x1e8] sm:$0xff]
        %v397 = vld [vmem:[%s178 + $0x1f0] sm:$0xff]
        %v398 = vld [vmem:[%s178 + $0x1f8] sm:$0xff]
        %v399 = vld [vmem:[%s178 + $0x200] sm:$0xff]
        %v400 = vld [vmem:[%s178 + $0x208] sm:$0xff]
        %v401 = vld [vmem:[%s178 + $0x210] sm:$0xff]
        %v402 = vld [vmem:[%s178 + $0x218] sm:$0xff]
        %v403 = vld [vmem:[%s178 + $0x220] sm:$0xff]
        %v404 = vld [vmem:[%s178 + $0x228] sm:$0xff]
        %v405 = vld [vmem:[%s178 + $0x230] sm:$0xff]
        %v406 = vld [vmem:[%s178 + $0x238] sm:$0xff]
        %v407 = vld [vmem:[%s178 + $0x240] sm:$0xff]
        %v408 = vld [vmem:[%s178 + $0x248] sm:$0xff]
        %v409 = vld [vmem:[%s178 + $0x250] sm:$0xff]
        %v410 = vld [vmem:[%s178 + $0x258] sm:$0xff]
        %v411 = vld [vmem:[%s178 + $0x260] sm:$0xff]
        %v412 = vld [vmem:[%s178 + $0x268] sm:$0xff]
        %v413 = vld [vmem:[%s178 + $0x270] sm:$0xff]
        %v414 = vld [vmem:[%s178 + $0x278] sm:$0xff]
        %v415 = vld [vmem:[%s178 + $0x280] sm:$0xff]
        %v416 = vld [vmem:[%s178 + $0x288] sm:$0xff]
        %v417 = vld [vmem:[%s178 + $0x290] sm:$0xff]
        %v418 = vld [vmem:[%s178 + $0x298] sm:$0xff]
        %v419 = vld [vmem:[%s178 + $0x2a0] sm:$0xff]
        %v420 = vld [vmem:[%s178 + $0x2a8] sm:$0xff]
        %v421 = vld [vmem:[%s178 + $0x2b0] sm:$0xff]
        %v422 = vld [vmem:[%s178 + $0x2b8] sm:$0xff]
        %v423 = vld [vmem:[%s178 + $0x2c0] sm:$0xff]
        %v424 = vld [vmem:[%s178 + $0x2c8] sm:$0xff]
        %v425 = vld [vmem:[%s178 + $0x2d0] sm:$0xff]
        %v426 = vld [vmem:[%s178 + $0x2d8] sm:$0xff]
        %v427 = vld [vmem:[%s178 + $0x2e0] sm:$0xff]
        %v428 = vld [vmem:[%s178 + $0x2e8] sm:$0xff]
        %v429 = vld [vmem:[%s178 + $0x2f0] sm:$0xff]
        %v430 = vld [vmem:[%s178 + $0x2f8] sm:$0xff]
        %v431 = vld [vmem:[%s178 + $0x300] sm:$0xff]
        %v432 = vld [vmem:[%s178 + $0x308] sm:$0xff]
        %v433 = vld [vmem:[%s178 + $0x310] sm:$0xff]
        %v434 = vld [vmem:[%s178 + $0x318] sm:$0xff]
        %v435 = vld [vmem:[%s178 + $0x320] sm:$0xff]
        %v436 = vld [vmem:[%s178 + $0x328] sm:$0xff]
        %v437 = vld [vmem:[%s178 + $0x330] sm:$0xff]
        %v438 = vld [vmem:[%s178 + $0x338] sm:$0xff]
        %v439 = vld [vmem:[%s178 + $0x340] sm:$0xff]
        %v440 = vld [vmem:[%s178 + $0x348] sm:$0xff]
        %v441 = vld [vmem:[%s178 + $0x350] sm:$0xff]
        %v442 = vld [vmem:[%s178 + $0x358] sm:$0xff]
        %v443 = vld [vmem:[%s178 + $0x360] sm:$0xff]
        %v444 = vld [vmem:[%s178 + $0x368] sm:$0xff]
        %v445 = vld [vmem:[%s178 + $0x370] sm:$0xff]
        %v446 = vld [vmem:[%s178 + $0x378] sm:$0xff]
        %v447 = vld [vmem:[%s178 + $0x380] sm:$0xff]
        %v448 = vld [vmem:[%s178 + $0x388] sm:$0xff]
        %v449 = vld [vmem:[%s178 + $0x390] sm:$0xff]
        %v450 = vld [vmem:[%s178 + $0x398] sm:$0xff]
        %v451 = vld [vmem:[%s178 + $0x3a0] sm:$0xff]
        %v452 = vld [vmem:[%s178 + $0x3a8] sm:$0xff]
        %v453 = vld [vmem:[%s178 + $0x3b0] sm:$0xff]
        %v454 = vld [vmem:[%s178 + $0x3b8] sm:$0xff]
        %v455 = vld [vmem:[%s178 + $0x3c0] sm:$0xff]
        %v456 = vld [vmem:[%s178 + $0x3c8] sm:$0xff]
        %v457 = vld [vmem:[%s178 + $0x3d0] sm:$0xff]
        %v458 = vld [vmem:[%s178 + $0x3d8] sm:$0xff]
        %v459 = vld [vmem:[%s178 + $0x3e0] sm:$0xff]
        %v460 = vld [vmem:[%s178 + $0x3e8] sm:$0xff]
        %v461 = vld [vmem:[%s178 + $0x3f0] sm:$0xff]
        %v462 = vld [vmem:[%s178 + $0x3f8] sm:$0xff]
        %v463 = vrcp.pop %v335
        %v464 = vmul.f32 %v207, %v463
        %v465 = vrcp.pop %v336
        %v466 = vmul.f32 %v208, %v465
        %v467 = vrcp.pop %v337
        %v468 = vmul.f32 %v209, %v467
        %v469 = vrcp.pop %v338
        %v470 = vmul.f32 %v210, %v469
        %v471 = vrcp.pop %v339
        %v472 = vmul.f32 %v211, %v471
        %v473 = vrcp.pop %v340
        %v474 = vmul.f32 %v212, %v473
        %v475 = vrcp.pop %v341
        %v476 = vmul.f32 %v213, %v475
        %v477 = vrcp.pop %v342
        %v478 = vmul.f32 %v214, %v477
        %v479 = vrcp.pop %v343
        %v480 = vmul.f32 %v215, %v479
        %v481 = vrcp.pop %v344
        %v482 = vmul.f32 %v216, %v481
        %v483 = vrcp.pop %v345
        %v484 = vmul.f32 %v217, %v483
        %v485 = vrcp.pop %v346
        %v486 = vmul.f32 %v218, %v485
        %v487 = vrcp.pop %v347
        %v488 = vmul.f32 %v219, %v487
        %v489 = vrcp.pop %v348
        %v490 = vmul.f32 %v220, %v489
        %v491 = vrcp.pop %v349
        %v492 = vmul.f32 %v221, %v491
        %v493 = vrcp.pop %v350
        %v494 = vmul.f32 %v222, %v493
        %v495 = vrcp.pop %v351
        %v496 = vmul.f32 %v223, %v495
        %v497 = vrcp.pop %v352
        %v498 = vmul.f32 %v224, %v497
        %v499 = vrcp.pop %v353
        %v500 = vmul.f32 %v225, %v499
        %v501 = vrcp.pop %v354
        %v502 = vmul.f32 %v226, %v501
        %v503 = vrcp.pop %v355
        %v504 = vmul.f32 %v227, %v503
        %v505 = vrcp.pop %v356
        %v506 = vmul.f32 %v228, %v505
        %v507 = vrcp.pop %v357
        %v508 = vmul.f32 %v229, %v507
        %v509 = vrcp.pop %v358
        %v510 = vmul.f32 %v230, %v509
        %v511 = vrcp.pop %v359
        %v512 = vmul.f32 %v231, %v511
        %v513 = vrcp.pop %v360
        %v514 = vmul.f32 %v232, %v513
        %v515 = vrcp.pop %v361
        %v516 = vmul.f32 %v233, %v515
        %v517 = vrcp.pop %v362
        %v518 = vmul.f32 %v234, %v517
        %v519 = vrcp.pop %v363
        %v520 = vmul.f32 %v235, %v519
        %v521 = vrcp.pop %v364
        %v522 = vmul.f32 %v236, %v521
        %v523 = vrcp.pop %v365
        %v524 = vmul.f32 %v237, %v523
        %v525 = vrcp.pop %v366
        %v526 = vmul.f32 %v238, %v525
        %v527 = vrcp.pop %v367
        %v528 = vmul.f32 %v239, %v527
        %v529 = vrcp.pop %v368
        %v530 = vmul.f32 %v240, %v529
        %v531 = vrcp.pop %v369
        %v532 = vmul.f32 %v241, %v531
        %v533 = vrcp.pop %v370
        %v534 = vmul.f32 %v242, %v533
        %v535 = vrcp.pop %v371
        %v536 = vmul.f32 %v243, %v535
        %v537 = vrcp.pop %v372
        %v538 = vmul.f32 %v244, %v537
        %v539 = vrcp.pop %v373
        %v540 = vmul.f32 %v245, %v539
        %v541 = vrcp.pop %v374
        %v542 = vmul.f32 %v246, %v541
        %v543 = vrcp.pop %v375
        %v544 = vmul.f32 %v247, %v543
        %v545 = vrcp.pop %v376
        %v546 = vmul.f32 %v248, %v545
        %v547 = vrcp.pop %v377
        %v548 = vmul.f32 %v249, %v547
        %v549 = vrcp.pop %v378
        %v550 = vmul.f32 %v250, %v549
        %v551 = vrcp.pop %v379
        %v552 = vmul.f32 %v251, %v551
        %v553 = vrcp.pop %v380
        %v554 = vmul.f32 %v252, %v553
        %v555 = vrcp.pop %v381
        %v556 = vmul.f32 %v253, %v555
        %v557 = vrcp.pop %v382
        %v558 = vmul.f32 %v254, %v557
        %v559 = vrcp.pop %v383
        %v560 = vmul.f32 %v255, %v559
        %v561 = vrcp.pop %v384
        %v562 = vmul.f32 %v256, %v561
        %v563 = vrcp.pop %v385
        %v564 = vmul.f32 %v257, %v563
        %v565 = vrcp.pop %v386
        %v566 = vmul.f32 %v258, %v565
        %v567 = vrcp.pop %v387
        %v568 = vmul.f32 %v259, %v567
        %v569 = vrcp.pop %v388
        %v570 = vmul.f32 %v260, %v569
        %v571 = vrcp.pop %v389
        %v572 = vmul.f32 %v261, %v571
        %v573 = vrcp.pop %v390
        %v574 = vmul.f32 %v262, %v573
        %v575 = vrcp.pop %v391
        %v576 = vmul.f32 %v263, %v575
        %v577 = vrcp.pop %v392
        %v578 = vmul.f32 %v264, %v577
        %v579 = vrcp.pop %v393
        %v580 = vmul.f32 %v265, %v579
        %v581 = vrcp.pop %v394
        %v582 = vmul.f32 %v266, %v581
        %v583 = vrcp.pop %v395
        %v584 = vmul.f32 %v267, %v583
        %v585 = vrcp.pop %v396
        %v586 = vmul.f32 %v268, %v585
        %v587 = vrcp.pop %v397
        %v588 = vmul.f32 %v269, %v587
        %v589 = vrcp.pop %v398
        %v590 = vmul.f32 %v270, %v589
        %v591 = vrcp.pop %v399
        %v592 = vmul.f32 %v271, %v591
        %v593 = vrcp.pop %v400
        %v594 = vmul.f32 %v272, %v593
        %v595 = vrcp.pop %v401
        %v596 = vmul.f32 %v273, %v595
        %v597 = vrcp.pop %v402
        %v598 = vmul.f32 %v274, %v597
        %v599 = vrcp.pop %v403
        %v600 = vmul.f32 %v275, %v599
        %v601 = vrcp.pop %v404
        %v602 = vmul.f32 %v276, %v601
        %v603 = vrcp.pop %v405
        %v604 = vmul.f32 %v277, %v603
        %v605 = vrcp.pop %v406
        %v606 = vmul.f32 %v278, %v605
        %v607 = vrcp.pop %v407
        %v608 = vmul.f32 %v279, %v607
        %v609 = vrcp.pop %v408
        %v610 = vmul.f32 %v280, %v609
        %v611 = vrcp.pop %v409
        %v612 = vmul.f32 %v281, %v611
        %v613 = vrcp.pop %v410
        %v614 = vmul.f32 %v282, %v613
        %v615 = vrcp.pop %v411
        %v616 = vmul.f32 %v283, %v615
        %v617 = vrcp.pop %v412
        %v618 = vmul.f32 %v284, %v617
        %v619 = vrcp.pop %v413
        %v620 = vmul.f32 %v285, %v619
        %v621 = vrcp.pop %v414
        %v622 = vmul.f32 %v286, %v621
        %v623 = vrcp.pop %v415
        %v624 = vmul.f32 %v287, %v623
        %v625 = vrcp.pop %v416
        %v626 = vmul.f32 %v288, %v625
        %v627 = vrcp.pop %v417
        %v628 = vmul.f32 %v289, %v627
        %v629 = vrcp.pop %v418
        %v630 = vmul.f32 %v290, %v629
        %v631 = vrcp.pop %v419
        %v632 = vmul.f32 %v291, %v631
        %v633 = vrcp.pop %v420
        %v634 = vmul.f32 %v292, %v633
        %v635 = vrcp.pop %v421
        %v636 = vmul.f32 %v293, %v635
        %v637 = vrcp.pop %v422
        %v638 = vmul.f32 %v294, %v637
        %v639 = vrcp.pop %v423
        %v640 = vmul.f32 %v295, %v639
        %v641 = vrcp.pop %v424
        %v642 = vmul.f32 %v296, %v641
        %v643 = vrcp.pop %v425
        %v644 = vmul.f32 %v297, %v643
        %v645 = vrcp.pop %v426
        %v646 = vmul.f32 %v298, %v645
        %v647 = vrcp.pop %v427
        %v648 = vmul.f32 %v299, %v647
        %v649 = vrcp.pop %v428
        %v650 = vmul.f32 %v300, %v649
        %v651 = vrcp.pop %v429
        %v652 = vmul.f32 %v301, %v651
        %v653 = vrcp.pop %v430
        %v654 = vmul.f32 %v302, %v653
        %v655 = vrcp.pop %v431
        %v656 = vmul.f32 %v303, %v655
        %v657 = vrcp.pop %v432
        %v658 = vmul.f32 %v304, %v657
        %v659 = vrcp.pop %v433
        %v660 = vmul.f32 %v305, %v659
        %v661 = vrcp.pop %v434
        %v662 = vmul.f32 %v306, %v661
        %v663 = vrcp.pop %v435
        %v664 = vmul.f32 %v307, %v663
        %v665 = vrcp.pop %v436
        %v666 = vmul.f32 %v308, %v665
        %v667 = vrcp.pop %v437
        %v668 = vmul.f32 %v309, %v667
        %v669 = vrcp.pop %v438
        %v670 = vmul.f32 %v310, %v669
        %v671 = vrcp.pop %v439
        %v672 = vmul.f32 %v311, %v671
        %v673 = vrcp.pop %v440
        %v674 = vmul.f32 %v312, %v673
        %v675 = vrcp.pop %v441
        %v676 = vmul.f32 %v313, %v675
        %v677 = vrcp.pop %v442
        %v678 = vmul.f32 %v314, %v677
        %v679 = vrcp.pop %v443
        %v680 = vmul.f32 %v315, %v679
        %v681 = vrcp.pop %v444
        %v682 = vmul.f32 %v316, %v681
        %v683 = vrcp.pop %v445
        %v684 = vmul.f32 %v317, %v683
        %v685 = vrcp.pop %v446
        %v686 = vmul.f32 %v318, %v685
        %v687 = vrcp.pop %v447
        %v688 = vmul.f32 %v319, %v687
        %v689 = vrcp.pop %v448
        %v690 = vmul.f32 %v320, %v689
        %v691 = vrcp.pop %v449
        %v692 = vmul.f32 %v321, %v691
        %v693 = vrcp.pop %v450
        %v694 = vmul.f32 %v322, %v693
        %v695 = vrcp.pop %v451
        %v696 = vmul.f32 %v323, %v695
        %v697 = vrcp.pop %v452
        %v698 = vmul.f32 %v324, %v697
        %v699 = vrcp.pop %v453
        %v700 = vmul.f32 %v325, %v699
        %v701 = vrcp.pop %v454
        %v702 = vmul.f32 %v326, %v701
        %v703 = vrcp.pop %v455
        %v704 = vmul.f32 %v327, %v703
        %v705 = vrcp.pop %v456
        %v706 = vmul.f32 %v328, %v705
        %v707 = vrcp.pop %v457
        %v708 = vmul.f32 %v329, %v707
        %v709 = vrcp.pop %v458
        %v710 = vmul.f32 %v330, %v709
        %v711 = vrcp.pop %v459
        %v712 = vmul.f32 %v331, %v711
        %v713 = vrcp.pop %v460
        %v714 = vmul.f32 %v332, %v713
        %v715 = vrcp.pop %v461
        %v716 = vmul.f32 %v333, %v715
        %v717 = vrcp.pop %v462
        %v718 = vmul.f32 %v334, %v717
        %719 = vst [vmem:[%s203] sm:$0xff] %v464
        %720 = vst [vmem:[%s203 + $0x8] sm:$0xff] %v466
        %721 = vst [vmem:[%s203 + $0x10] sm:$0xff] %v468
        %722 = vst [vmem:[%s203 + $0x18] sm:$0xff] %v470
        %723 = vst [vmem:[%s203 + $0x20] sm:$0xff] %v472
        %724 = vst [vmem:[%s203 + $0x28] sm:$0xff] %v474
        %725 = vst [vmem:[%s203 + $0x30] sm:$0xff] %v476
        %726 = vst [vmem:[%s203 + $0x38] sm:$0xff] %v478
        %727 = vst [vmem:[%s203 + $0x40] sm:$0xff] %v480
        %728 = vst [vmem:[%s203 + $0x48] sm:$0xff] %v482
        %729 = vst [vmem:[%s203 + $0x50] sm:$0xff] %v484
        %730 = vst [vmem:[%s203 + $0x58] sm:$0xff] %v486
        %731 = vst [vmem:[%s203 + $0x60] sm:$0xff] %v488
        %732 = vst [vmem:[%s203 + $0x68] sm:$0xff] %v490
        %733 = vst [vmem:[%s203 + $0x70] sm:$0xff] %v492
        %734 = vst [vmem:[%s203 + $0x78] sm:$0xff] %v494
        %735 = vst [vmem:[%s203 + $0x80] sm:$0xff] %v496
        %736 = vst [vmem:[%s203 + $0x88] sm:$0xff] %v498
        %737 = vst [vmem:[%s203 + $0x90] sm:$0xff] %v500
        %738 = vst [vmem:[%s203 + $0x98] sm:$0xff] %v502
        %739 = vst [vmem:[%s203 + $0xa0] sm:$0xff] %v504
        %740 = vst [vmem:[%s203 + $0xa8] sm:$0xff] %v506
        %741 = vst [vmem:[%s203 + $0xb0] sm:$0xff] %v508
        %742 = vst [vmem:[%s203 + $0xb8] sm:$0xff] %v510
        %743 = vst [vmem:[%s203 + $0xc0] sm:$0xff] %v512
        %744 = vst [vmem:[%s203 + $0xc8] sm:$0xff] %v514
        %745 = vst [vmem:[%s203 + $0xd0] sm:$0xff] %v516
        %746 = vst [vmem:[%s203 + $0xd8] sm:$0xff] %v518
        %747 = vst [vmem:[%s203 + $0xe0] sm:$0xff] %v520
        %748 = vst [vmem:[%s203 + $0xe8] sm:$0xff] %v522
        %749 = vst [vmem:[%s203 + $0xf0] sm:$0xff] %v524
        %750 = vst [vmem:[%s203 + $0xf8] sm:$0xff] %v526
        %751 = vst [vmem:[%s203 + $0x100] sm:$0xff] %v528
        %752 = vst [vmem:[%s203 + $0x108] sm:$0xff] %v530
        %753 = vst [vmem:[%s203 + $0x110] sm:$0xff] %v532
        %754 = vst [vmem:[%s203 + $0x118] sm:$0xff] %v534
        %755 = vst [vmem:[%s203 + $0x120] sm:$0xff] %v536
        %756 = vst [vmem:[%s203 + $0x128] sm:$0xff] %v538
        %757 = vst [vmem:[%s203 + $0x130] sm:$0xff] %v540
        %758 = vst [vmem:[%s203 + $0x138] sm:$0xff] %v542
        %759 = vst [vmem:[%s203 + $0x140] sm:$0xff] %v544
        %760 = vst [vmem:[%s203 + $0x148] sm:$0xff] %v546
        %761 = vst [vmem:[%s203 + $0x150] sm:$0xff] %v548
        %762 = vst [vmem:[%s203 + $0x158] sm:$0xff] %v550
        %763 = vst [vmem:[%s203 + $0x160] sm:$0xff] %v552
        %764 = vst [vmem:[%s203 + $0x168] sm:$0xff] %v554
        %765 = vst [vmem:[%s203 + $0x170] sm:$0xff] %v556
        %766 = vst [vmem:[%s203 + $0x178] sm:$0xff] %v558
        %767 = vst [vmem:[%s203 + $0x180] sm:$0xff] %v560
        %768 = vst [vmem:[%s203 + $0x188] sm:$0xff] %v562
        %769 = vst [vmem:[%s203 + $0x190] sm:$0xff] %v564
        %770 = vst [vmem:[%s203 + $0x198] sm:$0xff] %v566
        %771 = vst [vmem:[%s203 + $0x1a0] sm:$0xff] %v568
        %772 = vst [vmem:[%s203 + $0x1a8] sm:$0xff] %v570
        %773 = vst [vmem:[%s203 + $0x1b0] sm:$0xff] %v572
        %774 = vst [vmem:[%s203 + $0x1b8] sm:$0xff] %v574
        %775 = vst [vmem:[%s203 + $0x1c0] sm:$0xff] %v576
        %776 = vst [vmem:[%s203 + $0x1c8] sm:$0xff] %v578
        %777 = vst [vmem:[%s203 + $0x1d0] sm:$0xff] %v580
        %778 = vst [vmem:[%s203 + $0x1d8] sm:$0xff] %v582
        %779 = vst [vmem:[%s203 + $0x1e0] sm:$0xff] %v584
        %780 = vst [vmem:[%s203 + $0x1e8] sm:$0xff] %v586
        %781 = vst [vmem:[%s203 + $0x1f0] sm:$0xff] %v588
        %782 = vst [vmem:[%s203 + $0x1f8] sm:$0xff] %v590
        %783 = vst [vmem:[%s203 + $0x200] sm:$0xff] %v592
        %784 = vst [vmem:[%s203 + $0x208] sm:$0xff] %v594
        %785 = vst [vmem:[%s203 + $0x210] sm:$0xff] %v596
        %786 = vst [vmem:[%s203 + $0x218] sm:$0xff] %v598
        %787 = vst [vmem:[%s203 + $0x220] sm:$0xff] %v600
        %788 = vst [vmem:[%s203 + $0x228] sm:$0xff] %v602
        %789 = vst [vmem:[%s203 + $0x230] sm:$0xff] %v604
        %790 = vst [vmem:[%s203 + $0x238] sm:$0xff] %v606
        %791 = vst [vmem:[%s203 + $0x240] sm:$0xff] %v608
        %792 = vst [vmem:[%s203 + $0x248] sm:$0xff] %v610
        %793 = vst [vmem:[%s203 + $0x250] sm:$0xff] %v612
        %794 = vst [vmem:[%s203 + $0x258] sm:$0xff] %v614
        %795 = vst [vmem:[%s203 + $0x260] sm:$0xff] %v616
        %796 = vst [vmem:[%s203 + $0x268] sm:$0xff] %v618
        %797 = vst [vmem:[%s203 + $0x270] sm:$0xff] %v620
        %798 = vst [vmem:[%s203 + $0x278] sm:$0xff] %v622
        %799 = vst [vmem:[%s203 + $0x280] sm:$0xff] %v624
        %800 = vst [vmem:[%s203 + $0x288] sm:$0xff] %v626
        %801 = vst [vmem:[%s203 + $0x290] sm:$0xff] %v628
        %802 = vst [vmem:[%s203 + $0x298] sm:$0xff] %v630
        %803 = vst [vmem:[%s203 + $0x2a0] sm:$0xff] %v632
        %804 = vst [vmem:[%s203 + $0x2a8] sm:$0xff] %v634
        %805 = vst [vmem:[%s203 + $0x2b0] sm:$0xff] %v636
        %806 = vst [vmem:[%s203 + $0x2b8] sm:$0xff] %v638
        %807 = vst [vmem:[%s203 + $0x2c0] sm:$0xff] %v640
        %808 = vst [vmem:[%s203 + $0x2c8] sm:$0xff] %v642
        %809 = vst [vmem:[%s203 + $0x2d0] sm:$0xff] %v644
        %810 = vst [vmem:[%s203 + $0x2d8] sm:$0xff] %v646
        %811 = vst [vmem:[%s203 + $0x2e0] sm:$0xff] %v648
        %812 = vst [vmem:[%s203 + $0x2e8] sm:$0xff] %v650
        %813 = vst [vmem:[%s203 + $0x2f0] sm:$0xff] %v652
        %814 = vst [vmem:[%s203 + $0x2f8] sm:$0xff] %v654
        %815 = vst [vmem:[%s203 + $0x300] sm:$0xff] %v656
        %816 = vst [vmem:[%s203 + $0x308] sm:$0xff] %v658
        %817 = vst [vmem:[%s203 + $0x310] sm:$0xff] %v660
        %818 = vst [vmem:[%s203 + $0x318] sm:$0xff] %v662
        %819 = vst [vmem:[%s203 + $0x320] sm:$0xff] %v664
        %820 = vst [vmem:[%s203 + $0x328] sm:$0xff] %v666
        %821 = vst [vmem:[%s203 + $0x330] sm:$0xff] %v668
        %822 = vst [vmem:[%s203 + $0x338] sm:$0xff] %v670
        %823 = vst [vmem:[%s203 + $0x340] sm:$0xff] %v672
        %824 = vst [vmem:[%s203 + $0x348] sm:$0xff] %v674
        %825 = vst [vmem:[%s203 + $0x350] sm:$0xff] %v676
        %826 = vst [vmem:[%s203 + $0x358] sm:$0xff] %v678
        %827 = vst [vmem:[%s203 + $0x360] sm:$0xff] %v680
        %828 = vst [vmem:[%s203 + $0x368] sm:$0xff] %v682
        %829 = vst [vmem:[%s203 + $0x370] sm:$0xff] %v684
        %830 = vst [vmem:[%s203 + $0x378] sm:$0xff] %v686
        %831 = vst [vmem:[%s203 + $0x380] sm:$0xff] %v688
        %832 = vst [vmem:[%s203 + $0x388] sm:$0xff] %v690
        %833 = vst [vmem:[%s203 + $0x390] sm:$0xff] %v692
        %834 = vst [vmem:[%s203 + $0x398] sm:$0xff] %v694
        %835 = vst [vmem:[%s203 + $0x3a0] sm:$0xff] %v696
        %836 = vst [vmem:[%s203 + $0x3a8] sm:$0xff] %v698
        %837 = vst [vmem:[%s203 + $0x3b0] sm:$0xff] %v700
        %838 = vst [vmem:[%s203 + $0x3b8] sm:$0xff] %v702
        %839 = vst [vmem:[%s203 + $0x3c0] sm:$0xff] %v704
        %840 = vst [vmem:[%s203 + $0x3c8] sm:$0xff] %v706
        %841 = vst [vmem:[%s203 + $0x3d0] sm:$0xff] %v708
        %842 = vst [vmem:[%s203 + $0x3d8] sm:$0xff] %v710
        %843 = vst [vmem:[%s203 + $0x3e0] sm:$0xff] %v712
        %844 = vst [vmem:[%s203 + $0x3e8] sm:$0xff] %v714
        %845 = vst [vmem:[%s203 + $0x3f0] sm:$0xff] %v716
        %846 = vst [vmem:[%s203 + $0x3f8] sm:$0xff] %v718
        %s847 = sand.u32 %s82, 1
        %s848 = scalar_lea.sflag [#allocation4], %s847
        %s849 = sand.u32 %s82, 1
        %s850 = smul.addr %s849, 1024
        %s851 = scalar_lea.vmem [#allocation7], %s850
        // Predicated region
        $region37: #{tpu_custom_call.1} parent=27 // pred_check
          %p852 = pneg %p92
        $region38: #{tpu_custom_call.1} parent=27 // pred_check_branch
          %854 = sbr.rel (%p852) target = $region40
        $region39: #{tpu_custom_call.1} parent=27 // pred_region
          %s855 = smul.u32 16, %s22
          %s857 = ssub.s32 16384, 16384
          %858 = vsyncadd %s848, %s857
          %s859 = smul.addr %s855, 8
          %s860 = smul.addr %s859, 128
          %s861 = scalar_lea.hbm %s2, %s860
          %s862 = sshll.u32 %s851, 4
          %s863 = int_to_ptr.vmem [resolvable:$true] %s862
          %868 = dma.vmem_to_hbm [thread:$0]  %s863, 16384, %s861, %s848, 1024, 1024, 64
        $region40: #{tpu_custom_call.1} parent=27 // pred_fallthru
          _
      $region28: #{tpu_custom_call.1} parent=5 // pred_fallthru
        _
      %p869 = scmp.le.s32.totalorder 2, %s17
      // Predicated region
      $region41: #{tpu_custom_call.1} parent=5 // pred_check
        %p870 = pneg %p869
      $region42: #{tpu_custom_call.1} parent=5 // pred_check_branch
        %872 = sbr.rel (%p870) target = $region44
      $region43: #{tpu_custom_call.1} parent=5 // pred_region
        %s873 = ssub.s32 %s17, 2
        // Predicated region
        $region45: #{tpu_custom_call.1} parent=43 // pred_check
          %p874 = pneg %p98
        $region46: #{tpu_custom_call.1} parent=43 // pred_check_branch
          %876 = sbr.rel (%p874) target = $region48
        $region47: #{tpu_custom_call.1} parent=43 // pred_region
          %s877 = sand.u32 %s83, 1
          %s878 = scalar_lea.sflag [#allocation4], %s877
          %s879 = sand.u32 %s83, 1
          %s880 = smul.addr %s879, 1024
          %s881 = scalar_lea.vmem [#allocation7], %s880
          %882 = dma.done %s878, 16384
        $region48: #{tpu_custom_call.1} parent=43 // pred_fallthru
          _
      $region44: #{tpu_custom_call.1} parent=5 // pred_fallthru
        _
    $region6: #{tpu_custom_call.1} parent=1 // loop_footer
      %s21 = sadd.s32 1, %s17
    $region7: #{tpu_custom_call.1} parent=1 // loop_footer_branch
      %16 = sbr.rel target = $region3
    $region8: #{tpu_custom_call.1} parent=1 // loop_exit
      _
    %883 = vsyncpa [#allocation3], 1
    %s884 = scalar_lea.sflag [#allocation3], 1
    %885 = vsyncpa %s884, 1
    %886 = vsyncpa [#allocation6], 1
    %s887 = scalar_lea.sflag [#allocation6], 1
    %888 = vsyncpa %s887, 1
    %889 = vsyncpa [#allocation4], 1
    %s890 = scalar_lea.sflag [#allocation4], 1
    %891 = vsyncpa %s890, 1

</llo_original>
